<compile_context>
chip_gen: v5e
topology: v5e:2x2
jax: 0.10.0
libtpu: 0.0.40
codegen_flags: <defaults>
</compile_context>

<pallas_src>
import jax
import jax.numpy as jnp
from jax.experimental import pallas as pl
from jax.experimental.pallas import tpu as pltpu


def siamese_kernel(xs_ref, w_enc_ref, b_enc_ref, w_fc_ref, b_fc_ref,
                   out_ref, acc_ref):
    """K-tiled fused Siamese forward.

    xs_ref   : (2*Bp, tk)  bf16  - x1 rows stacked over x2 rows (padded to Bp)
    w_enc_ref: (tk, H)     bf16  - shared encoder weight K-tile
    b_enc_ref: (1, H)      f32   - encoder bias (folded into acc init)
    w_fc_ref : (1, H)      f32   - fc1 weight as a row (head runs on the VPU)
    b_fc_ref : (1, 1)      f32   - SMEM scalar
    out_ref  : (Bp, 1)     f32
    acc_ref  : (2*Bp, H)   f32   - VMEM accumulator, persists across the K grid
    """
    k = pl.program_id(0)

    @pl.when(k == 0)
    def _():
        # Initialize with the encoder bias broadcast over all rows, so the
        # finalize step only needs the ReLU.
        acc_ref[...] = jnp.broadcast_to(b_enc_ref[...], acc_ref.shape)

    # One MXU matmul shared by both branches (bf16 in, f32 accumulate).
    acc_ref[...] += jnp.dot(xs_ref[...], w_enc_ref[...],
                            preferred_element_type=jnp.float32)

    @pl.when(k == pl.num_programs(0) - 1)
    def _():
        bp = out_ref.shape[0]
        emb = jnp.maximum(acc_ref[...], 0.0)                      # (2*Bp, H) f32
        d = jnp.abs(emb[:bp, :] - emb[bp:, :])                    # (Bp, H)
        # N=1 head: VPU multiply + lane reduction instead of an MXU matmul.
        logit = (jnp.sum(d * w_fc_ref[...], axis=-1, keepdims=True)
                 + b_fc_ref[0, 0])
        out_ref[...] = jax.nn.sigmoid(logit).astype(out_ref.dtype)


def _round_up(x, m):
    return (x + m - 1) // m * m


def _pick_tk(d_in, max_tk):
    """Largest K tile <= max_tk that divides d_in and is a lane multiple."""
    if d_in % 128 != 0 or d_in <= max_tk:
        return d_in                      # single full-K block is always legal
    tk = (max_tk // 128) * 128
    while d_in % tk != 0:
        tk -= 128
    return max(tk, 128)


def siamese_forward(x1, x2, w_enc, b_enc, w_fc, b_fc, *, max_tk=2048):
    """x1, x2: (B, C, H, W) NCHW float32. Returns (B, 1) sigmoid scores."""
    B = x1.shape[0]
    x1f = x1.reshape(B, -1)                          # (B, D_in), NCHW flatten
    x2f = x2.reshape(B, -1)
    D_in = x1f.shape[1]
    H = w_enc.shape[1]                               # 512

    # Pad each branch's batch to a sublane multiple and stack, so the shared
    # encoder weight is pushed through the MXU exactly once per K-tile.
    Bp = _round_up(B, 8)
    pad = [(0, Bp - B), (0, 0)]
    xs = jnp.concatenate([jnp.pad(x1f, pad), jnp.pad(x2f, pad)], axis=0)
    xs = xs.astype(jnp.bfloat16)                     # (2*Bp, D_in)
    w_enc_bf16 = w_enc.astype(jnp.bfloat16)          # (D_in, H)

    b_enc2 = b_enc.reshape(1, H).astype(jnp.float32)
    w_fc_row = w_fc.reshape(1, H).astype(jnp.float32)    # (1, H)
    b_fc2 = b_fc.reshape(1, 1).astype(jnp.float32)

    tk = _pick_tk(D_in, max_tk)
    kt = D_in // tk

    grid_spec = pltpu.PrefetchScalarGridSpec(
        num_scalar_prefetch=0,
        grid=(kt,),
        in_specs=[
            pl.BlockSpec((2 * Bp, tk), lambda k: (0, k)),   # xs (K-tiled)
            pl.BlockSpec((tk, H), lambda k: (k, 0)),        # w_enc (K-tiled)
            pl.BlockSpec((1, H), lambda k: (0, 0)),         # encoder bias
            pl.BlockSpec((1, H), lambda k: (0, 0)),         # fc1 weight row
            pl.BlockSpec(memory_space=pltpu.MemorySpace.SMEM),  # fc1 bias scalar
        ],
        out_specs=pl.BlockSpec((Bp, 1), lambda k: (0, 0)),
        scratch_shapes=[pltpu.VMEM((2 * Bp, H), jnp.float32)],
    )

    # Scoped VMEM sized from the actual tiles (double-buffered bf16 inputs +
    # f32 accumulator) with headroom; stays far under v7x's 64 MiB physical.
    tile_bytes = 2 * (2 * Bp * tk * 2 + tk * H * 2) + 2 * Bp * H * 4
    vmem_limit = int(min(max(4 * tile_bytes, 8 << 20), 32 << 20))

    out_padded = pl.pallas_call(
        siamese_kernel,
        out_shape=jax.ShapeDtypeStruct((Bp, 1), jnp.float32),
        grid_spec=grid_spec,
        compiler_params=pltpu.CompilerParams(
            dimension_semantics=("arbitrary",),   # K is a reduction axis
            vmem_limit_bytes=vmem_limit,
        ),
    )(xs, w_enc_bf16, b_enc2, w_fc_row, b_fc2)

    return out_padded[:B]


if __name__ == "__main__":
    key = jax.random.PRNGKey(0)
    k_x1, k_x2, k_we, k_be, k_wf, k_bf = jax.random.split(key, 6)

    # Small shapes consistent with the forward: two NCHW images -> 512-d
    # embeddings -> Linear(512, 1) -> Sigmoid.
    B, C, Hs, Ws = 2, 4, 16, 16
    D_in, HID = C * Hs * Ws, 512

    x1 = jax.random.normal(k_x1, (B, C, Hs, Ws), dtype=jnp.float32)
    x2 = jax.random.normal(k_x2, (B, C, Hs, Ws), dtype=jnp.float32)

    # Deterministic synthetic parameters (stand-in for the checkpoint).
    w_enc = jax.random.normal(k_we, (D_in, HID), dtype=jnp.float32) * 0.02
    b_enc = jax.random.normal(k_be, (HID,), dtype=jnp.float32) * 0.02
    w_fc = jax.random.normal(k_wf, (HID, 1), dtype=jnp.float32) * 0.05
    b_fc = jax.random.normal(k_bf, (1,), dtype=jnp.float32) * 0.05

    # max_tk=256 so the toy D_in=1024 exercises a 4-step K-tiled pipeline.
    out = siamese_forward(x1, x2, w_enc, b_enc, w_fc, b_fc, max_tk=256)
    out = jax.block_until_ready(out)

    # Pure-JAX reference with the same bf16 input/weight quantization.
    def ref(a, b):
        af = a.reshape(B, -1).astype(jnp.bfloat16).astype(jnp.float32)
        bf = b.reshape(B, -1).astype(jnp.bfloat16).astype(jnp.float32)
        we = w_enc.astype(jnp.bfloat16).astype(jnp.float32)
        f1 = jnp.maximum(af @ we + b_enc, 0.0)
        f2 = jnp.maximum(bf @ we + b_enc, 0.0)
        return jax.nn.sigmoid(jnp.abs(f1 - f2) @ w_fc + b_fc)

    expected = ref(x1, x2)
    assert out.shape == (B, 1)
    assert jnp.allclose(out, expected, atol=2e-3, rtol=2e-3), (out, expected)
    print("KERNEL_OK")
</pallas_src>

<mosaic_0001>
module attributes {stable_mosaic.version = 11 : i64} {
  func.func @siamese_kernel(%arg0: i32, %arg1: memref<16x256xbf16, #tpu.memory_space<vmem>>, %arg2: memref<256x512xbf16, #tpu.memory_space<vmem>>, %arg3: memref<1x512xf32, #tpu.memory_space<vmem>>, %arg4: memref<1x512xf32, #tpu.memory_space<vmem>>, %arg5: memref<1x1xf32, #tpu.memory_space<smem>>, %arg6: memref<8x1xf32, #tpu.memory_space<vmem>>, %arg7: memref<16x512xf32, #tpu.memory_space<vmem>>) attributes {dimension_semantics = [#tpu.dimension_semantics<arbitrary>], iteration_bounds = array<i64: 4>, scalar_prefetch = 0 : i64, scratch_operands = 1 : i64, tpu.core_type = #tpu.core_type<tc>, window_params = [{transform_indices = @transform_0, window_bounds = array<i64: 16, 256>}, {transform_indices = @transform_1, window_bounds = array<i64: 256, 512>}, {pipeline_mode = #tpu.pipeline_mode<synchronous>, transform_indices = @transform_2, window_bounds = array<i64: 1, 512>}, {pipeline_mode = #tpu.pipeline_mode<synchronous>, transform_indices = @transform_3, window_bounds = array<i64: 1, 512>}, {transform_indices = @transform_4, window_bounds = array<i64: 1, 1>}, {pipeline_mode = #tpu.pipeline_mode<synchronous>, transform_indices = @transform_5, window_bounds = array<i64: 8, 1>}]} {
    %c0_i32 = arith.constant 0 : i32
    %0 = arith.cmpi eq, %arg0, %c0_i32 : i32
    %1 = arith.extui %0 : i1 to i32
    %c0_i32_0 = arith.constant 0 : i32
    %2 = arith.cmpi ne, %1, %c0_i32_0 : i32
    scf.if %2 {
      %c0_9 = arith.constant 0 : index
      %c0_10 = arith.constant 0 : index
      %12 = vector.load %arg3[%c0_9, %c0_10] : memref<1x512xf32, #tpu.memory_space<vmem>>, vector<1x512xf32>
      %13 = vector.shape_cast %12 : vector<1x512xf32> to vector<1x512xf32>
      %14 = vector.broadcast %13 : vector<1x512xf32> to vector<16x512xf32>
      %c0_11 = arith.constant 0 : index
      %c0_12 = arith.constant 0 : index
      %15 = vector.load %arg7[%c0_11, %c0_12] : memref<16x512xf32, #tpu.memory_space<vmem>>, vector<16x512xf32>
      tpu.vector_store %arg7[%c0_11, %c0_12], %14 {strides = array<i32>} : memref<16x512xf32, #tpu.memory_space<vmem>>, vector<16x512xf32>,
    } else {
    }
    %c0 = arith.constant 0 : index
    %c0_1 = arith.constant 0 : index
    %3 = vector.load %arg7[%c0, %c0_1] : memref<16x512xf32, #tpu.memory_space<vmem>>, vector<16x512xf32>
    %c0_2 = arith.constant 0 : index
    %c0_3 = arith.constant 0 : index
    %4 = vector.load %arg1[%c0_2, %c0_3] : memref<16x256xbf16, #tpu.memory_space<vmem>>, vector<16x256xbf16>
    %c0_4 = arith.constant 0 : index
    %c0_5 = arith.constant 0 : index
    %5 = vector.load %arg2[%c0_4, %c0_5] : memref<256x512xbf16, #tpu.memory_space<vmem>>, vector<256x512xbf16>
    %cst = arith.constant dense<0.000000e+00> : vector<16x512xf32>
    %6 = tpu.matmul %4, %5, %cst {dimension_numbers = #tpu.dot_dimension_numbers<[1], [0], [0], [1], [0, 0, 1, 1], [], []>} : vector<16x256xbf16>, vector<256x512xbf16>, vector<16x512xf32> -> vector<16x512xf32>
    %7 = arith.addf %3, %6 : vector<16x512xf32>
    %c0_6 = arith.constant 0 : index
    %c0_7 = arith.constant 0 : index
    %8 = vector.load %arg7[%c0_6, %c0_7] : memref<16x512xf32, #tpu.memory_space<vmem>>, vector<16x512xf32>
    tpu.vector_store %arg7[%c0_6, %c0_7], %7 {strides = array<i32>} : memref<16x512xf32, #tpu.memory_space<vmem>>, vector<16x512xf32>,
    %c3_i32 = arith.constant 3 : i32
    %9 = arith.cmpi eq, %arg0, %c3_i32 : i32
    %10 = arith.extui %9 : i1 to i32
    %c0_i32_8 = arith.constant 0 : i32
    %11 = arith.cmpi ne, %10, %c0_i32_8 : i32
    scf.if %11 {
      %c0_9 = arith.constant 0 : index
      %c0_10 = arith.constant 0 : index
      %12 = vector.load %arg7[%c0_9, %c0_10] : memref<16x512xf32, #tpu.memory_space<vmem>>, vector<16x512xf32>
      %cst_11 = arith.constant 0.000000e+00 : f32
      %13 = vector.broadcast %cst_11 : f32 to vector<16x512xf32>
      %14 = arith.maximumf %12, %13 : vector<16x512xf32>
      %15 = vector.extract_strided_slice %14 {offsets = [0, 0], sizes = [8, 512], strides = [1, 1]} : vector<16x512xf32> to vector<8x512xf32>
      %16 = vector.extract_strided_slice %14 {offsets = [8, 0], sizes = [8, 512], strides = [1, 1]} : vector<16x512xf32> to vector<8x512xf32>
      %17 = arith.subf %15, %16 : vector<8x512xf32>
      %18 = math.absf %17 : vector<8x512xf32>
      %c0_12 = arith.constant 0 : index
      %c0_13 = arith.constant 0 : index
      %19 = vector.load %arg4[%c0_12, %c0_13] : memref<1x512xf32, #tpu.memory_space<vmem>>, vector<1x512xf32>
      %20 = vector.broadcast %19 : vector<1x512xf32> to vector<8x512xf32>
      %21 = arith.mulf %18, %20 : vector<8x512xf32>
      %cst_14 = arith.constant dense<0.000000e+00> : vector<8xf32>
      %22 = vector.multi_reduction <add>, %21, %cst_14 [1] : vector<8x512xf32> to vector<8xf32>
      %23 = vector.shape_cast %22 : vector<8xf32> to vector<8x1xf32>
      %c0_15 = arith.constant 0 : index
      %c0_16 = arith.constant 0 : index
      %24 = memref.load %arg5[%c0_15, %c0_16] : memref<1x1xf32, #tpu.memory_space<smem>>
      %25 = vector.broadcast %24 : f32 to vector<8x1xf32>
      %26 = arith.addf %23, %25 : vector<8x1xf32>
      %27 = arith.negf %26 : vector<8x1xf32>
      %28 = math.exp %27 : vector<8x1xf32>
      %cst_17 = arith.constant 1.000000e+00 : f32
      %29 = vector.broadcast %cst_17 : f32 to vector<8x1xf32>
      %30 = arith.addf %29, %28 : vector<8x1xf32>
      %31 = arith.divf %29, %30 : vector<8x1xf32>
      %c0_18 = arith.constant 0 : index
      %c0_19 = arith.constant 0 : index
      %32 = vector.load %arg6[%c0_18, %c0_19] : memref<8x1xf32, #tpu.memory_space<vmem>>, vector<8x1xf32>
      tpu.vector_store %arg6[%c0_18, %c0_19], %31 {strides = array<i32>} : memref<8x1xf32, #tpu.memory_space<vmem>>, vector<8x1xf32>,
    } else {
    }
    return
  }
  func.func @transform_0(%arg0: i32) -> (i32, i32) {
    %c0_i32 = arith.constant 0 : i32
    %c0_i32_0 = arith.constant 0 : i32
    return %c0_i32, %arg0 : i32, i32
  }
  func.func @transform_1(%arg0: i32) -> (i32, i32) {
    %c0_i32 = arith.constant 0 : i32
    %c0_i32_0 = arith.constant 0 : i32
    return %arg0, %c0_i32 : i32, i32
  }
  func.func @transform_2(%arg0: i32) -> (i32, i32) {
    %c0_i32 = arith.constant 0 : i32
    %c0_i32_0 = arith.constant 0 : i32
    %c0_i32_1 = arith.constant 0 : i32
    return %c0_i32, %c0_i32_0 : i32, i32
  }
  func.func @transform_3(%arg0: i32) -> (i32, i32) {
    %c0_i32 = arith.constant 0 : i32
    %c0_i32_0 = arith.constant 0 : i32
    %c0_i32_1 = arith.constant 0 : i32
    return %c0_i32, %c0_i32_0 : i32, i32
  }
  func.func @transform_4(%arg0: i32) -> (i32, i32) {
    %c0_i32 = arith.constant 0 : i32
    %c0_i32_0 = arith.constant 0 : i32
    %c0_i32_1 = arith.constant 0 : i32
    return %c0_i32, %c0_i32_0 : i32, i32
  }
  func.func @transform_5(%arg0: i32) -> (i32, i32) {
    %c0_i32 = arith.constant 0 : i32
    %c0_i32_0 = arith.constant 0 : i32
    %c0_i32_1 = arith.constant 0 : i32
    return %c0_i32, %c0_i32_0 : i32, i32
  }
}

</mosaic_0001>

<llo_original>
// kernel: tpu_custom_call.1
$region0: #{tpu_custom_call.1}
  #allocation0 [shape = 'u32[]', space=smem, size = 0x4, offset = 0x4, fixed_abs, tag = 'smem constant byte address 0x4 - core index']
  #allocation1 [shape = 'u32[72,128]{1,0:T(1,128)}', space=vmem, size = 0x9000, scoped, tag = 'internal scratch']
  #allocation2 [shape = 'f32[16,512]{1,0:T(8,128)}', space=vmem, size = 0x8000, scoped, tag = 'scratch operand']
  #allocation3 [shape = 'f32[1,1]{1,0:T(1,128)S(6)}', space=smem, size = 0x200, scoped, tag = 'scoped memory for tpu_custom_call.1']
  %s0 = inlined_call_operand.hbm [shape: bf16[16,1024], index: 0, kind: input, shape index: {}]
  %s1 = inlined_call_operand.hbm [shape: bf16[1024,512], index: 1, kind: input, shape index: {}]
  %s2 = inlined_call_operand.hbm [shape: f32[1,512], index: 2, kind: input, shape index: {}]
  %s3 = inlined_call_operand.vmem [shape: f32[1,512], index: 3, kind: input, shape index: {}]
  %s4 = inlined_call_operand.<no memory space> [shape: f32[1,1], index: 4, kind: input, shape index: {}]
  %s5 = inlined_call_operand.vmem [shape: f32[8,1], index: 5, kind: output, shape index: {}]
  %s6 = sld [smem:[#allocation0]]
  $region73: #{tpu_custom_call.1} parent=0
    _
  %s8 = ssub.s32 1, %s6
  %s9 = scalar_select 0, %s8, %s6
  %10 = sst [smem:[#allocation3]] %s4
  $region1: #{tpu_custom_call.1} parent=0
    #allocation4 [shape = 'u8[16384]{0}', space=vmem, size = 0x4000, scoped, tag = 'input window, operand 0']
    #allocation5 [shape = 's32[2]{0}', space=sflag, size = 0x8, scoped, tag = 'scoped memory for tpu_custom_call.1']
    #allocation6 [shape = 'u8[524288]{0}', space=vmem, size = 0x80000, scoped, tag = 'input window, operand 1']
    #allocation7 [shape = 's32[2]{0}', space=sflag, size = 0x8, scoped, tag = 'scoped memory for tpu_custom_call.1']
    #allocation8 [shape = 'u8[2048]{0}', space=vmem, size = 0x800, scoped, tag = 'input window, operand 2, single buffered']
    %11 = vsyncpa [#allocation5], 0
    %s12 = scalar_lea.sflag [#allocation5], 1
    %13 = vsyncpa %s12, 0
    %14 = vsyncpa [#allocation7], 0
    %s15 = scalar_lea.sflag [#allocation7], 1
    %16 = vsyncpa %s15, 0
    loop: start=0, step=1, limit=6
    $region2: #{tpu_custom_call.1} parent=1 // loop_pre_header
      _
    $region3: #{tpu_custom_call.1} parent=1 // loop_header
      %s18 = sphi 0, %s22
      %p19 = scmp.ge.s32.totalorder %s18, 6
      %s28 = sphi 0, %s30
      %s31 = sphi 0, %s28
      %s32 = sphi 0, %s31
      %s48 = sphi 0, %s32
      %s54 = sphi 0, %s56
      %s57 = sphi 0, %s54
      %s58 = sphi 0, %s57
      %s74 = sphi 0, %s58
      %s78 = sphi 0, %s78
      %s80 = sphi 0, %s78
      %s81 = sphi 0, %s80
      %s95 = sphi 0, %s81
      %s99 = sphi 0, %s99
      %s101 = sphi 0, %s99
      %s102 = sphi 0, %s101
      %s116 = sphi 0, %s102
      %s120 = sphi 0, %s120
      %s122 = sphi 0, %s120
      %s123 = sphi 0, %s122
      %s137 = sphi 0, %s123
      %s141 = sphi 0, %s141
      %s143 = sphi 0, %s141
      %s144 = sphi 0, %s143
      %s158 = sphi 0, %s144
    $region4: #{tpu_custom_call.1} parent=1 // loop_header_branch
      %21 = sbr.rel (%p19) target = $region8
    $region5: #{tpu_custom_call.1} parent=1 // loop_body
      %s23 = ssub.s32 %s18, 1
      %s24 = ssub.s32 %s18, 2
      %s25 = sadd.s32 %s18, 1
      %s26 = ssub.s32 %s18, %s25
      %p27 = scmp.eq.s32.totalorder %s26, 0
      %s29 = sadd.s32 %s28, 1
      %s30 = scalar_select %p27, %s28, %s29
      %p33 = pneg %p27
      %p34 = scmp.eq.s32.totalorder %s18, 3
      %p35 = por %p33, %p34
      %p36 = scmp.ne.s32.totalorder %s28, %s31
      %p37 = scmp.eq.s32.totalorder %s18, 0
      %p38 = por %p36, %p37
      %p39 = scmp.ne.s32.totalorder %s28, %s31
      %p40 = scmp.eq.s32.totalorder %s23, 3
      %p41 = por %p39, %p40
      %p42 = scmp.ne.s32.totalorder %s31, %s32
      %p43 = scmp.eq.s32.totalorder %s23, 0
      %p44 = por %p42, %p43
      %p45 = scmp.ne.s32.totalorder %s31, %s32
      %p46 = scmp.eq.s32.totalorder %s24, 3
      %p47 = por %p45, %p46
      %p49 = scmp.ne.s32.totalorder %s32, %s48
      %p50 = scmp.eq.s32.totalorder %s24, 0
      %p51 = por %p49, %p50
      %s52 = ssub.s32 %s18, %s25
      %p53 = scmp.eq.s32.totalorder %s52, 0
      %s55 = sadd.s32 %s54, 1
      %s56 = scalar_select %p53, %s54, %s55
      %p59 = pneg %p53
      %p60 = scmp.eq.s32.totalorder %s18, 3
      %p61 = por %p59, %p60
      %p62 = scmp.ne.s32.totalorder %s54, %s57
      %p63 = scmp.eq.s32.totalorder %s18, 0
      %p64 = por %p62, %p63
      %p65 = scmp.ne.s32.totalorder %s54, %s57
      %p66 = scmp.eq.s32.totalorder %s23, 3
      %p67 = por %p65, %p66
      %p68 = scmp.ne.s32.totalorder %s57, %s58
      %p69 = scmp.eq.s32.totalorder %s23, 0
      %p70 = por %p68, %p69
      %p71 = scmp.ne.s32.totalorder %s57, %s58
      %p72 = scmp.eq.s32.totalorder %s24, 3
      %p73 = por %p71, %p72
      %p75 = scmp.ne.s32.totalorder %s58, %s74
      %p76 = scmp.eq.s32.totalorder %s24, 0
      %p77 = por %p75, %p76
      %s79 = sadd.s32 %s78, 1
      %p82 = scmp.eq.s32.totalorder %s18, 3
      %p83 = scmp.ne.s32.totalorder %s78, %s80
      %p84 = scmp.eq.s32.totalorder %s18, 0
      %p85 = por %p83, %p84
      %p86 = scmp.ne.s32.totalorder %s78, %s80
      %p87 = scmp.eq.s32.totalorder %s23, 3
      %p88 = por %p86, %p87
      %p89 = scmp.ne.s32.totalorder %s80, %s81
      %p90 = scmp.eq.s32.totalorder %s23, 0
      %p91 = por %p89, %p90
      %p92 = scmp.ne.s32.totalorder %s80, %s81
      %p93 = scmp.eq.s32.totalorder %s24, 3
      %p94 = por %p92, %p93
      %p96 = scmp.ne.s32.totalorder %s81, %s95
      %p97 = scmp.eq.s32.totalorder %s24, 0
      %p98 = por %p96, %p97
      %s100 = sadd.s32 %s99, 1
      %p103 = scmp.eq.s32.totalorder %s18, 3
      %p104 = scmp.ne.s32.totalorder %s99, %s101
      %p105 = scmp.eq.s32.totalorder %s18, 0
      %p106 = por %p104, %p105
      %p107 = scmp.ne.s32.totalorder %s99, %s101
      %p108 = scmp.eq.s32.totalorder %s23, 3
      %p109 = por %p107, %p108
      %p110 = scmp.ne.s32.totalorder %s101, %s102
      %p111 = scmp.eq.s32.totalorder %s23, 0
      %p112 = por %p110, %p111
      %p113 = scmp.ne.s32.totalorder %s101, %s102
      %p114 = scmp.eq.s32.totalorder %s24, 3
      %p115 = por %p113, %p114
      %p117 = scmp.ne.s32.totalorder %s102, %s116
      %p118 = scmp.eq.s32.totalorder %s24, 0
      %p119 = por %p117, %p118
      %s121 = sadd.s32 %s120, 1
      %p124 = scmp.eq.s32.totalorder %s18, 3
      %p125 = scmp.ne.s32.totalorder %s120, %s122
      %p126 = scmp.eq.s32.totalorder %s18, 0
      %p127 = por %p125, %p126
      %p128 = scmp.ne.s32.totalorder %s120, %s122
      %p129 = scmp.eq.s32.totalorder %s23, 3
      %p130 = por %p128, %p129
      %p131 = scmp.ne.s32.totalorder %s122, %s123
      %p132 = scmp.eq.s32.totalorder %s23, 0
      %p133 = por %p131, %p132
      %p134 = scmp.ne.s32.totalorder %s122, %s123
      %p135 = scmp.eq.s32.totalorder %s24, 3
      %p136 = por %p134, %p135
      %p138 = scmp.ne.s32.totalorder %s123, %s137
      %p139 = scmp.eq.s32.totalorder %s24, 0
      %p140 = por %p138, %p139
      %s142 = sadd.s32 %s141, 1
      %p145 = scmp.eq.s32.totalorder %s18, 3
      %p146 = scmp.ne.s32.totalorder %s141, %s143
      %p147 = scmp.eq.s32.totalorder %s18, 0
      %p148 = por %p146, %p147
      %p149 = scmp.ne.s32.totalorder %s141, %s143
      %p150 = scmp.eq.s32.totalorder %s23, 3
      %p151 = por %p149, %p150
      %p152 = scmp.ne.s32.totalorder %s143, %s144
      %p153 = scmp.eq.s32.totalorder %s23, 0
      %p154 = por %p152, %p153
      %p155 = scmp.ne.s32.totalorder %s143, %s144
      %p156 = scmp.eq.s32.totalorder %s24, 3
      %p157 = por %p155, %p156
      %p159 = scmp.ne.s32.totalorder %s144, %s158
      %p160 = scmp.eq.s32.totalorder %s24, 0
      %p161 = por %p159, %p160
      %p162 = scmp.le.s32.totalorder 1, %s18
      %p163 = scmp.lt.s32.totalorder %s18, 5
      %p164 = pnand %p162, %p163
      %p165 = pneg %p164
      // Predicated region
      $region9: #{tpu_custom_call.1} parent=5 // pred_check
        _
      $region10: #{tpu_custom_call.1} parent=5 // pred_check_branch
        %167 = sbr.rel (%p164) target = $region12
      $region11: #{tpu_custom_call.1} parent=5 // pred_region
        %s168 = ssub.s32 %s18, 1
        // Predicated region
        $region13: #{tpu_custom_call.1} parent=11 // pred_check
          %p169 = pneg %p91
        $region14: #{tpu_custom_call.1} parent=11 // pred_check_branch
          %171 = sbr.rel (%p169) target = $region16
        $region15: #{tpu_custom_call.1} parent=11 // pred_region
          %173 = vsyncadd [#allocation7], 0
          %s175 = sshll.u32 %s2, 4
          %s176 = int_to_ptr.hbm [resolvable:$true] %s175
          %s177 = sshll.u32 [#allocation8], 4
          %s178 = int_to_ptr.vmem [resolvable:$true] %s177
          %180 = dma.hbm_to_vmem [thread:$0]  %s176, 64, %s178, [#allocation7]
        $region16: #{tpu_custom_call.1} parent=11 // pred_fallthru
          _
        // Predicated region
        $region17: #{tpu_custom_call.1} parent=11 // pred_check
          %p181 = pneg %p112
        $region18: #{tpu_custom_call.1} parent=11 // pred_check_branch
          %183 = sbr.rel (%p181) target = $region20
        $region19: #{tpu_custom_call.1} parent=11 // pred_region
          _
        $region20: #{tpu_custom_call.1} parent=11 // pred_fallthru
          _
        // Predicated region
        $region21: #{tpu_custom_call.1} parent=11 // pred_check
          %p184 = pneg %p133
        $region22: #{tpu_custom_call.1} parent=11 // pred_check_branch
          %186 = sbr.rel (%p184) target = $region24
        $region23: #{tpu_custom_call.1} parent=11 // pred_region
          _
        $region24: #{tpu_custom_call.1} parent=11 // pred_fallthru
          _
      $region12: #{tpu_custom_call.1} parent=5 // pred_fallthru
        _
      %p187 = scmp.lt.s32.totalorder %s18, 4
      // Predicated region
      $region25: #{tpu_custom_call.1} parent=5 // pred_check
        %p188 = pneg %p187
      $region26: #{tpu_custom_call.1} parent=5 // pred_check_branch
        %190 = sbr.rel (%p188) target = $region28
      $region27: #{tpu_custom_call.1} parent=5 // pred_region
        // Predicated region
        $region29: #{tpu_custom_call.1} parent=27 // pred_check
          %p191 = pneg %p38
        $region30: #{tpu_custom_call.1} parent=27 // pred_check_branch
          %193 = sbr.rel (%p191) target = $region32
        $region31: #{tpu_custom_call.1} parent=27 // pred_region
          %s194 = sand.u32 %s28, 1
          %s195 = scalar_lea.sflag [#allocation5], %s194
          %s196 = sand.u32 %s28, 1
          %s197 = smul.addr %s196, 16
          %s198 = scalar_lea.vmem [#allocation4], %s197
          %s199 = smul.u32 2, %s18
          %201 = vsyncadd %s195, 0
          %s202 = smul.addr %s199, 4
          %s203 = scalar_lea.hbm %s0, %s202
          %s204 = sshll.u32 %s203, 4
          %s205 = int_to_ptr.hbm [resolvable:$true] %s204
          %s206 = sshll.u32 %s198, 4
          %s207 = int_to_ptr.vmem [resolvable:$true] %s206
          %212 = dma.hbm_to_vmem [thread:$0]  %s205, 256, %s207, %s195, 512, 128, 8
        $region32: #{tpu_custom_call.1} parent=27 // pred_fallthru
          _
        // Predicated region
        $region33: #{tpu_custom_call.1} parent=27 // pred_check
          %p213 = pneg %p64
        $region34: #{tpu_custom_call.1} parent=27 // pred_check_branch
          %215 = sbr.rel (%p213) target = $region36
        $region35: #{tpu_custom_call.1} parent=27 // pred_region
          %s216 = sand.u32 %s18, 1
          %s217 = scalar_lea.sflag [#allocation7], %s216
          %s218 = sand.u32 %s54, 1
          %s219 = smul.addr %s218, 512
          %s220 = scalar_lea.vmem [#allocation6], %s219
          %s221 = smul.u32 32, %s18
          %223 = vsyncadd %s217, 0
          %s224 = smul.addr %s221, 4
          %s225 = smul.addr %s224, 4
          %s226 = scalar_lea.hbm %s1, %s225
          %s227 = sshll.u32 %s226, 4
          %s228 = int_to_ptr.hbm [resolvable:$true] %s227
          %s229 = sshll.u32 %s220, 4
          %s230 = int_to_ptr.vmem [resolvable:$true] %s229
          %235 = dma.hbm_to_vmem [thread:$0]  %s228, 8192, %s230, %s217, 256, 256, 16
        $region36: #{tpu_custom_call.1} parent=27 // pred_fallthru
          _
      $region28: #{tpu_custom_call.1} parent=5 // pred_fallthru
        _
      %p236 = scmp.le.s32.totalorder 1, %s18
      %p237 = scmp.lt.s32.totalorder %s18, 5
      %p238 = pnand %p236, %p237
      %p239 = pneg %p238
      // Predicated region
      $region37: #{tpu_custom_call.1} parent=5 // pred_check
        _
      $region38: #{tpu_custom_call.1} parent=5 // pred_check_branch
        %241 = sbr.rel (%p238) target = $region40
      $region39: #{tpu_custom_call.1} parent=5 // pred_region
        %s242 = ssub.s32 %s18, 1
        %s243 = sand.u32 %s31, 1
        %s244 = scalar_lea.sflag [#allocation5], %s243
        %s245 = sand.u32 %s31, 1
        %s246 = smul.addr %s245, 16
        %s247 = scalar_lea.vmem [#allocation4], %s246
        // Predicated region
        $region41: #{tpu_custom_call.1} parent=39 // pred_check
          %p248 = pneg %p44
        $region42: #{tpu_custom_call.1} parent=39 // pred_check_branch
          %250 = sbr.rel (%p248) target = $region44
        $region43: #{tpu_custom_call.1} parent=39 // pred_region
          %252 = dma.done %s244, 256
        $region44: #{tpu_custom_call.1} parent=39 // pred_fallthru
          _
        %s253 = sand.u32 %s23, 1
        %s254 = scalar_lea.sflag [#allocation7], %s253
        %s255 = sand.u32 %s57, 1
        %s256 = smul.addr %s255, 512
        %s257 = scalar_lea.vmem [#allocation6], %s256
        // Predicated region
        $region45: #{tpu_custom_call.1} parent=39 // pred_check
          %p258 = pneg %p70
        $region46: #{tpu_custom_call.1} parent=39 // pred_check_branch
          %260 = sbr.rel (%p258) target = $region48
        $region47: #{tpu_custom_call.1} parent=39 // pred_region
          %262 = dma.done %s254, 8192
        $region48: #{tpu_custom_call.1} parent=39 // pred_fallthru
          _
        // Predicated region
        $region49: #{tpu_custom_call.1} parent=39 // pred_check
          %p263 = pneg %p91
        $region50: #{tpu_custom_call.1} parent=39 // pred_check_branch
          %265 = sbr.rel (%p263) target = $region52
        $region51: #{tpu_custom_call.1} parent=39 // pred_region
          %267 = dma.done [#allocation7], 64
        $region52: #{tpu_custom_call.1} parent=39 // pred_fallthru
          _
        %s268 = sand.u32 %s31, 1
        %s269 = scalar_lea.sflag [#allocation5], %s268
        %s270 = sand.u32 %s31, 1
        %s271 = smul.addr %s270, 16
        %s272 = scalar_lea.vmem [#allocation4], %s271
        %p273 = pneg %p44
        %p274 = pneg %p41
        %s275 = sand.u32 %s23, 1
        %s276 = scalar_lea.sflag [#allocation7], %s275
        %s277 = sand.u32 %s57, 1
        %s278 = smul.addr %s277, 512
        %s279 = scalar_lea.vmem [#allocation6], %s278
        %p280 = pneg %p70
        %p281 = pneg %p67
        %p282 = pneg %p91
        %p283 = pneg %p88
        %p284 = pneg %p112
        %p285 = pneg %p109
        %p286 = pneg %p133
        %p287 = pneg %p130
        %p288 = pneg %p154
        %p289 = pneg %p151
        %s290 = smul.u32 2, %s23
        %s291 = smul.u32 32, %s23
        %p292 = scmp.eq.s32.totalorder %s23, 0
        // Predicated region
        $region53: #{tpu_custom_call.1} parent=39 // pred_check
          %p293 = pneg %p292
        $region54: #{tpu_custom_call.1} parent=39 // pred_check_branch
          %295 = sbr.rel (%p293) target = $region56
        $region55: #{tpu_custom_call.1} parent=39 // pred_region
          %v296 = vld [vmem:[#allocation8] sm:$0xf]
          %v298 = vperm.slane %v296, 0
          %v299 = vperm.slane %v296, 1
          %v300 = vperm.slane %v296, 2
          %v301 = vperm.slane %v296, 3
          %306 = vst [vmem:[#allocation2] sm:$0xff] %v298
          %307 = vst [vmem:[#allocation2 + $0x8] sm:$0xff] %v299
          %308 = vst [vmem:[#allocation2 + $0x10] sm:$0xff] %v300
          %309 = vst [vmem:[#allocation2 + $0x18] sm:$0xff] %v301
          %310 = vst [vmem:[#allocation2 + $0x20] sm:$0xff] %v298
          %311 = vst [vmem:[#allocation2 + $0x28] sm:$0xff] %v299
          %312 = vst [vmem:[#allocation2 + $0x30] sm:$0xff] %v300
          %313 = vst [vmem:[#allocation2 + $0x38] sm:$0xff] %v301
        $region56: #{tpu_custom_call.1} parent=39 // pred_fallthru
          _
        %v314 = vld [vmem:[#allocation2] sm:$0xff]
        %v315 = vld [vmem:[#allocation2 + $0x8] sm:$0xff]
        %v316 = vld [vmem:[#allocation2 + $0x10] sm:$0xff]
        %v317 = vld [vmem:[#allocation2 + $0x18] sm:$0xff]
        %v318 = vld [vmem:[#allocation2 + $0x20] sm:$0xff]
        %v319 = vld [vmem:[#allocation2 + $0x28] sm:$0xff]
        %v320 = vld [vmem:[#allocation2 + $0x30] sm:$0xff]
        %v321 = vld [vmem:[#allocation2 + $0x38] sm:$0xff]
        %v322 = vld [vmem:[%s247] sm:$0xff]
        %v323 = vld [vmem:[%s247 + $0x8] sm:$0xff]
        %v324 = vld [vmem:[%s257] sm:$0xff]
        %v325 = vld [vmem:[%s257 + $0x8] sm:$0xff]
        %v326 = vld [vmem:[%s257 + $0x10] sm:$0xff]
        %v327 = vld [vmem:[%s257 + $0x18] sm:$0xff]
        %v328 = vld [vmem:[%s257 + $0x20] sm:$0xff]
        %v329 = vld [vmem:[%s257 + $0x28] sm:$0xff]
        %v330 = vld [vmem:[%s257 + $0x30] sm:$0xff]
        %v331 = vld [vmem:[%s257 + $0x38] sm:$0xff]
        %v332 = vld [vmem:[%s257 + $0x40] sm:$0xff]
        %v333 = vld [vmem:[%s257 + $0x48] sm:$0xff]
        %v334 = vld [vmem:[%s257 + $0x50] sm:$0xff]
        %v335 = vld [vmem:[%s257 + $0x58] sm:$0xff]
        %v336 = vld [vmem:[%s257 + $0x60] sm:$0xff]
        %v337 = vld [vmem:[%s257 + $0x68] sm:$0xff]
        %v338 = vld [vmem:[%s257 + $0x70] sm:$0xff]
        %v339 = vld [vmem:[%s257 + $0x78] sm:$0xff]
        %v340 = vld [vmem:[%s257 + $0x80] sm:$0xff]
        %v341 = vld [vmem:[%s257 + $0x88] sm:$0xff]
        %v342 = vld [vmem:[%s257 + $0x90] sm:$0xff]
        %v343 = vld [vmem:[%s257 + $0x98] sm:$0xff]
        %v344 = vld [vmem:[%s257 + $0xa0] sm:$0xff]
        %v345 = vld [vmem:[%s257 + $0xa8] sm:$0xff]
        %v346 = vld [vmem:[%s257 + $0xb0] sm:$0xff]
        %v347 = vld [vmem:[%s257 + $0xb8] sm:$0xff]
        %v348 = vld [vmem:[%s257 + $0xc0] sm:$0xff]
        %v349 = vld [vmem:[%s257 + $0xc8] sm:$0xff]
        %v350 = vld [vmem:[%s257 + $0xd0] sm:$0xff]
        %v351 = vld [vmem:[%s257 + $0xd8] sm:$0xff]
        %v352 = vld [vmem:[%s257 + $0xe0] sm:$0xff]
        %v353 = vld [vmem:[%s257 + $0xe8] sm:$0xff]
        %v354 = vld [vmem:[%s257 + $0xf0] sm:$0xff]
        %v355 = vld [vmem:[%s257 + $0xf8] sm:$0xff]
        %v356 = vld [vmem:[%s257 + $0x100] sm:$0xff]
        %v357 = vld [vmem:[%s257 + $0x108] sm:$0xff]
        %v358 = vld [vmem:[%s257 + $0x110] sm:$0xff]
        %v359 = vld [vmem:[%s257 + $0x118] sm:$0xff]
        %v360 = vld [vmem:[%s257 + $0x120] sm:$0xff]
        %v361 = vld [vmem:[%s257 + $0x128] sm:$0xff]
        %v362 = vld [vmem:[%s257 + $0x130] sm:$0xff]
        %v363 = vld [vmem:[%s257 + $0x138] sm:$0xff]
        %v364 = vld [vmem:[%s257 + $0x140] sm:$0xff]
        %v365 = vld [vmem:[%s257 + $0x148] sm:$0xff]
        %v366 = vld [vmem:[%s257 + $0x150] sm:$0xff]
        %v367 = vld [vmem:[%s257 + $0x158] sm:$0xff]
        %v368 = vld [vmem:[%s257 + $0x160] sm:$0xff]
        %v369 = vld [vmem:[%s257 + $0x168] sm:$0xff]
        %v370 = vld [vmem:[%s257 + $0x170] sm:$0xff]
        %v371 = vld [vmem:[%s257 + $0x178] sm:$0xff]
        %v372 = vld [vmem:[%s257 + $0x180] sm:$0xff]
        %v373 = vld [vmem:[%s257 + $0x188] sm:$0xff]
        %v374 = vld [vmem:[%s257 + $0x190] sm:$0xff]
        %v375 = vld [vmem:[%s257 + $0x198] sm:$0xff]
        %v376 = vld [vmem:[%s257 + $0x1a0] sm:$0xff]
        %v377 = vld [vmem:[%s257 + $0x1a8] sm:$0xff]
        %v378 = vld [vmem:[%s257 + $0x1b0] sm:$0xff]
        %v379 = vld [vmem:[%s257 + $0x1b8] sm:$0xff]
        %v380 = vld [vmem:[%s257 + $0x1c0] sm:$0xff]
        %v381 = vld [vmem:[%s257 + $0x1c8] sm:$0xff]
        %v382 = vld [vmem:[%s257 + $0x1d0] sm:$0xff]
        %v383 = vld [vmem:[%s257 + $0x1d8] sm:$0xff]
        %v384 = vld [vmem:[%s257 + $0x1e0] sm:$0xff]
        %v385 = vld [vmem:[%s257 + $0x1e8] sm:$0xff]
        %v386 = vld [vmem:[%s257 + $0x1f0] sm:$0xff]
        %v387 = vld [vmem:[%s257 + $0x1f8] sm:$0xff]
        %v390 = vunpack.c.l.b16 %v322
        %v391 = vunpack.c.h.b16 %v322
        %v392 = vunpack.c.l.b16 %v323
        %v393 = vunpack.c.h.b16 %v323
        %v394 = vpack.c.b16 %v392, %v390
        %v395 = vpack.c.b16 %v393, %v391
        %v462 = vunpack.c.l.b16 %v324
        %v463 = vunpack.c.h.b16 %v324
        %v464 = vunpack.c.l.b16 %v325
        %v465 = vunpack.c.h.b16 %v325
        %v466 = vunpack.c.l.b16 %v326
        %v467 = vunpack.c.h.b16 %v326
        %v468 = vunpack.c.l.b16 %v327
        %v469 = vunpack.c.h.b16 %v327
        %v470 = vunpack.c.l.b16 %v328
        %v471 = vunpack.c.h.b16 %v328
        %v472 = vunpack.c.l.b16 %v329
        %v473 = vunpack.c.h.b16 %v329
        %v474 = vunpack.c.l.b16 %v330
        %v475 = vunpack.c.h.b16 %v330
        %v476 = vunpack.c.l.b16 %v331
        %v477 = vunpack.c.h.b16 %v331
        %v478 = vunpack.c.l.b16 %v332
        %v479 = vunpack.c.h.b16 %v332
        %v480 = vunpack.c.l.b16 %v333
        %v481 = vunpack.c.h.b16 %v333
        %v482 = vunpack.c.l.b16 %v334
        %v483 = vunpack.c.h.b16 %v334
        %v484 = vunpack.c.l.b16 %v335
        %v485 = vunpack.c.h.b16 %v335
        %v486 = vunpack.c.l.b16 %v336
        %v487 = vunpack.c.h.b16 %v336
        %v488 = vunpack.c.l.b16 %v337
        %v489 = vunpack.c.h.b16 %v337
        %v490 = vunpack.c.l.b16 %v338
        %v491 = vunpack.c.h.b16 %v338
        %v492 = vunpack.c.l.b16 %v339
        %v493 = vunpack.c.h.b16 %v339
        %v494 = vunpack.c.l.b16 %v340
        %v495 = vunpack.c.h.b16 %v340
        %v496 = vunpack.c.l.b16 %v341
        %v497 = vunpack.c.h.b16 %v341
        %v498 = vunpack.c.l.b16 %v342
        %v499 = vunpack.c.h.b16 %v342
        %v500 = vunpack.c.l.b16 %v343
        %v501 = vunpack.c.h.b16 %v343
        %v502 = vunpack.c.l.b16 %v344
        %v503 = vunpack.c.h.b16 %v344
        %v504 = vunpack.c.l.b16 %v345
        %v505 = vunpack.c.h.b16 %v345
        %v506 = vunpack.c.l.b16 %v346
        %v507 = vunpack.c.h.b16 %v346
        %v508 = vunpack.c.l.b16 %v347
        %v509 = vunpack.c.h.b16 %v347
        %v510 = vunpack.c.l.b16 %v348
        %v511 = vunpack.c.h.b16 %v348
        %v512 = vunpack.c.l.b16 %v349
        %v513 = vunpack.c.h.b16 %v349
        %v514 = vunpack.c.l.b16 %v350
        %v515 = vunpack.c.h.b16 %v350
        %v516 = vunpack.c.l.b16 %v351
        %v517 = vunpack.c.h.b16 %v351
        %v518 = vunpack.c.l.b16 %v352
        %v519 = vunpack.c.h.b16 %v352
        %v520 = vunpack.c.l.b16 %v353
        %v521 = vunpack.c.h.b16 %v353
        %v522 = vunpack.c.l.b16 %v354
        %v523 = vunpack.c.h.b16 %v354
        %v524 = vunpack.c.l.b16 %v355
        %v525 = vunpack.c.h.b16 %v355
        %v526 = vunpack.c.l.b16 %v356
        %v527 = vunpack.c.h.b16 %v356
        %v528 = vunpack.c.l.b16 %v357
        %v529 = vunpack.c.h.b16 %v357
        %v530 = vunpack.c.l.b16 %v358
        %v531 = vunpack.c.h.b16 %v358
        %v532 = vunpack.c.l.b16 %v359
        %v533 = vunpack.c.h.b16 %v359
        %v534 = vunpack.c.l.b16 %v360
        %v535 = vunpack.c.h.b16 %v360
        %v536 = vunpack.c.l.b16 %v361
        %v537 = vunpack.c.h.b16 %v361
        %v538 = vunpack.c.l.b16 %v362
        %v539 = vunpack.c.h.b16 %v362
        %v540 = vunpack.c.l.b16 %v363
        %v541 = vunpack.c.h.b16 %v363
        %v542 = vunpack.c.l.b16 %v364
        %v543 = vunpack.c.h.b16 %v364
        %v544 = vunpack.c.l.b16 %v365
        %v545 = vunpack.c.h.b16 %v365
        %v546 = vunpack.c.l.b16 %v366
        %v547 = vunpack.c.h.b16 %v366
        %v548 = vunpack.c.l.b16 %v367
        %v549 = vunpack.c.h.b16 %v367
        %v550 = vunpack.c.l.b16 %v368
        %v551 = vunpack.c.h.b16 %v368
        %v552 = vunpack.c.l.b16 %v369
        %v553 = vunpack.c.h.b16 %v369
        %v554 = vunpack.c.l.b16 %v370
        %v555 = vunpack.c.h.b16 %v370
        %v556 = vunpack.c.l.b16 %v371
        %v557 = vunpack.c.h.b16 %v371
        %v558 = vunpack.c.l.b16 %v372
        %v559 = vunpack.c.h.b16 %v372
        %v560 = vunpack.c.l.b16 %v373
        %v561 = vunpack.c.h.b16 %v373
        %v562 = vunpack.c.l.b16 %v374
        %v563 = vunpack.c.h.b16 %v374
        %v564 = vunpack.c.l.b16 %v375
        %v565 = vunpack.c.h.b16 %v375
        %v566 = vunpack.c.l.b16 %v376
        %v567 = vunpack.c.h.b16 %v376
        %v568 = vunpack.c.l.b16 %v377
        %v569 = vunpack.c.h.b16 %v377
        %v570 = vunpack.c.l.b16 %v378
        %v571 = vunpack.c.h.b16 %v378
        %v572 = vunpack.c.l.b16 %v379
        %v573 = vunpack.c.h.b16 %v379
        %v574 = vunpack.c.l.b16 %v380
        %v575 = vunpack.c.h.b16 %v380
        %v576 = vunpack.c.l.b16 %v381
        %v577 = vunpack.c.h.b16 %v381
        %v578 = vunpack.c.l.b16 %v382
        %v579 = vunpack.c.h.b16 %v382
        %v580 = vunpack.c.l.b16 %v383
        %v581 = vunpack.c.h.b16 %v383
        %v582 = vunpack.c.l.b16 %v384
        %v583 = vunpack.c.h.b16 %v384
        %v584 = vunpack.c.l.b16 %v385
        %v585 = vunpack.c.h.b16 %v385
        %v586 = vunpack.c.l.b16 %v386
        %v587 = vunpack.c.h.b16 %v386
        %v588 = vunpack.c.l.b16 %v387
        %v589 = vunpack.c.h.b16 %v387
        %v590 = vpack.c.b16 %v466, %v462
        %v591 = vpack.c.b16 %v467, %v463
        %v592 = vpack.c.b16 %v468, %v464
        %v593 = vpack.c.b16 %v469, %v465
        %v594 = vpack.c.b16 %v474, %v470
        %v595 = vpack.c.b16 %v475, %v471
        %v596 = vpack.c.b16 %v476, %v472
        %v597 = vpack.c.b16 %v477, %v473
        %v598 = vpack.c.b16 %v482, %v478
        %v599 = vpack.c.b16 %v483, %v479
        %v600 = vpack.c.b16 %v484, %v480
        %v601 = vpack.c.b16 %v485, %v481
        %v602 = vpack.c.b16 %v490, %v486
        %v603 = vpack.c.b16 %v491, %v487
        %v604 = vpack.c.b16 %v492, %v488
        %v605 = vpack.c.b16 %v493, %v489
        %v606 = vpack.c.b16 %v498, %v494
        %v607 = vpack.c.b16 %v499, %v495
        %v608 = vpack.c.b16 %v500, %v496
        %v609 = vpack.c.b16 %v501, %v497
        %v610 = vpack.c.b16 %v506, %v502
        %v611 = vpack.c.b16 %v507, %v503
        %v612 = vpack.c.b16 %v508, %v504
        %v613 = vpack.c.b16 %v509, %v505
        %v614 = vpack.c.b16 %v514, %v510
        %v615 = vpack.c.b16 %v515, %v511
        %v616 = vpack.c.b16 %v516, %v512
        %v617 = vpack.c.b16 %v517, %v513
        %v618 = vpack.c.b16 %v522, %v518
        %v619 = vpack.c.b16 %v523, %v519
        %v620 = vpack.c.b16 %v524, %v520
        %v621 = vpack.c.b16 %v525, %v521
        %v622 = vpack.c.b16 %v530, %v526
        %v623 = vpack.c.b16 %v531, %v527
        %v624 = vpack.c.b16 %v532, %v528
        %v625 = vpack.c.b16 %v533, %v529
        %v626 = vpack.c.b16 %v538, %v534
        %v627 = vpack.c.b16 %v539, %v535
        %v628 = vpack.c.b16 %v540, %v536
        %v629 = vpack.c.b16 %v541, %v537
        %v630 = vpack.c.b16 %v546, %v542
        %v631 = vpack.c.b16 %v547, %v543
        %v632 = vpack.c.b16 %v548, %v544
        %v633 = vpack.c.b16 %v549, %v545
        %v634 = vpack.c.b16 %v554, %v550
        %v635 = vpack.c.b16 %v555, %v551
        %v636 = vpack.c.b16 %v556, %v552
        %v637 = vpack.c.b16 %v557, %v553
        %v638 = vpack.c.b16 %v562, %v558
        %v639 = vpack.c.b16 %v563, %v559
        %v640 = vpack.c.b16 %v564, %v560
        %v641 = vpack.c.b16 %v565, %v561
        %v642 = vpack.c.b16 %v570, %v566
        %v643 = vpack.c.b16 %v571, %v567
        %v644 = vpack.c.b16 %v572, %v568
        %v645 = vpack.c.b16 %v573, %v569
        %v646 = vpack.c.b16 %v578, %v574
        %v647 = vpack.c.b16 %v579, %v575
        %v648 = vpack.c.b16 %v580, %v576
        %v649 = vpack.c.b16 %v581, %v577
        %v650 = vpack.c.b16 %v586, %v582
        %v651 = vpack.c.b16 %v587, %v583
        %v652 = vpack.c.b16 %v588, %v584
        %v653 = vpack.c.b16 %v589, %v585
        %718 = vmatpush.bf16.msra.mxu0 %v618
        %719 = vmatpush.bf16.msra.mxu0 %v614
        %720 = vmatpush.bf16.msra.mxu0 %v610
        %721 = vmatpush.bf16.msra.mxu0 %v606
        %722 = vmatpush.bf16.msra.mxu0 %v602
        %723 = vmatpush.bf16.msra.mxu0 %v598
        %724 = vmatpush.bf16.msra.mxu0 %v594
        %725 = vmatpush.bf16.msra.mxu0 %v590
        %726 = vmatmul.bf16.gmra.mxu0 %v394
        %v727 = vpop.f32.mrf.mxu0
        %v728 = vadd.f32 0.0, %v727
        %v729 = vpop.f32.mrf.mxu0
        %v730 = vadd.f32 0.0, %v729
        %731 = vdwg.mxu0
        %732 = vmatpush.bf16.msra.mxu0 %v650
        %733 = vmatpush.bf16.msra.mxu0 %v646
        %734 = vmatpush.bf16.msra.mxu0 %v642
        %735 = vmatpush.bf16.msra.mxu0 %v638
        %736 = vmatpush.bf16.msra.mxu0 %v634
        %737 = vmatpush.bf16.msra.mxu0 %v630
        %738 = vmatpush.bf16.msra.mxu0 %v626
        %739 = vmatpush.bf16.msra.mxu0 %v622
        %740 = vmatmul.bf16.gmra.mxu0 %v395
        %v741 = vpop.f32.mrf.mxu0
        %v742 = vadd.f32 %v728, %v741
        %v743 = vpop.f32.mrf.mxu0
        %v744 = vadd.f32 %v730, %v743
        %745 = vdwg.mxu0
        %746 = vmatpush.bf16.msra.mxu0 %v619
        %747 = vmatpush.bf16.msra.mxu0 %v615
        %748 = vmatpush.bf16.msra.mxu0 %v611
        %749 = vmatpush.bf16.msra.mxu0 %v607
        %750 = vmatpush.bf16.msra.mxu0 %v603
        %751 = vmatpush.bf16.msra.mxu0 %v599
        %752 = vmatpush.bf16.msra.mxu0 %v595
        %753 = vmatpush.bf16.msra.mxu0 %v591
        %754 = vmatmul.bf16.gmra.mxu0 %v394
        %v755 = vpop.f32.mrf.mxu0
        %v756 = vadd.f32 0.0, %v755
        %v757 = vpop.f32.mrf.mxu0
        %v758 = vadd.f32 0.0, %v757
        %759 = vdwg.mxu0
        %760 = vmatpush.bf16.msra.mxu0 %v651
        %761 = vmatpush.bf16.msra.mxu0 %v647
        %762 = vmatpush.bf16.msra.mxu0 %v643
        %763 = vmatpush.bf16.msra.mxu0 %v639
        %764 = vmatpush.bf16.msra.mxu0 %v635
        %765 = vmatpush.bf16.msra.mxu0 %v631
        %766 = vmatpush.bf16.msra.mxu0 %v627
        %767 = vmatpush.bf16.msra.mxu0 %v623
        %768 = vmatmul.bf16.gmra.mxu0 %v395
        %v769 = vpop.f32.mrf.mxu0
        %v770 = vadd.f32 %v756, %v769
        %v771 = vpop.f32.mrf.mxu0
        %v772 = vadd.f32 %v758, %v771
        %773 = vdwg.mxu0
        %774 = vmatpush.bf16.msra.mxu0 %v620
        %775 = vmatpush.bf16.msra.mxu0 %v616
        %776 = vmatpush.bf16.msra.mxu0 %v612
        %777 = vmatpush.bf16.msra.mxu0 %v608
        %778 = vmatpush.bf16.msra.mxu0 %v604
        %779 = vmatpush.bf16.msra.mxu0 %v600
        %780 = vmatpush.bf16.msra.mxu0 %v596
        %781 = vmatpush.bf16.msra.mxu0 %v592
        %782 = vmatmul.bf16.gmra.mxu0 %v394
        %v783 = vpop.f32.mrf.mxu0
        %v784 = vadd.f32 0.0, %v783
        %v785 = vpop.f32.mrf.mxu0
        %v786 = vadd.f32 0.0, %v785
        %787 = vdwg.mxu0
        %788 = vmatpush.bf16.msra.mxu0 %v652
        %789 = vmatpush.bf16.msra.mxu0 %v648
        %790 = vmatpush.bf16.msra.mxu0 %v644
        %791 = vmatpush.bf16.msra.mxu0 %v640
        %792 = vmatpush.bf16.msra.mxu0 %v636
        %793 = vmatpush.bf16.msra.mxu0 %v632
        %794 = vmatpush.bf16.msra.mxu0 %v628
        %795 = vmatpush.bf16.msra.mxu0 %v624
        %796 = vmatmul.bf16.gmra.mxu0 %v395
        %v797 = vpop.f32.mrf.mxu0
        %v798 = vadd.f32 %v784, %v797
        %v799 = vpop.f32.mrf.mxu0
        %v800 = vadd.f32 %v786, %v799
        %801 = vdwg.mxu0
        %802 = vmatpush.bf16.msra.mxu0 %v621
        %803 = vmatpush.bf16.msra.mxu0 %v617
        %804 = vmatpush.bf16.msra.mxu0 %v613
        %805 = vmatpush.bf16.msra.mxu0 %v609
        %806 = vmatpush.bf16.msra.mxu0 %v605
        %807 = vmatpush.bf16.msra.mxu0 %v601
        %808 = vmatpush.bf16.msra.mxu0 %v597
        %809 = vmatpush.bf16.msra.mxu0 %v593
        %810 = vmatmul.bf16.gmra.mxu0 %v394
        %v811 = vpop.f32.mrf.mxu0
        %v812 = vadd.f32 0.0, %v811
        %v813 = vpop.f32.mrf.mxu0
        %v814 = vadd.f32 0.0, %v813
        %815 = vdwg.mxu0
        %816 = vmatpush.bf16.msra.mxu0 %v653
        %817 = vmatpush.bf16.msra.mxu0 %v649
        %818 = vmatpush.bf16.msra.mxu0 %v645
        %819 = vmatpush.bf16.msra.mxu0 %v641
        %820 = vmatpush.bf16.msra.mxu0 %v637
        %821 = vmatpush.bf16.msra.mxu0 %v633
        %822 = vmatpush.bf16.msra.mxu0 %v629
        %823 = vmatpush.bf16.msra.mxu0 %v625
        %824 = vmatmul.bf16.gmra.mxu0 %v395
        %v825 = vpop.f32.mrf.mxu0
        %v826 = vadd.f32 %v812, %v825
        %v827 = vpop.f32.mrf.mxu0
        %v828 = vadd.f32 %v814, %v827
        %829 = vdwg.mxu0
        %v830 = vadd.f32 %v314, %v742
        %v831 = vadd.f32 %v315, %v770
        %v832 = vadd.f32 %v316, %v798
        %v833 = vadd.f32 %v317, %v826
        %v834 = vadd.f32 %v318, %v744
        %v835 = vadd.f32 %v319, %v772
        %v836 = vadd.f32 %v320, %v800
        %v837 = vadd.f32 %v321, %v828
        %838 = vst [vmem:[#allocation2] sm:$0xff] %v830
        %839 = vst [vmem:[#allocation2 + $0x8] sm:$0xff] %v831
        %840 = vst [vmem:[#allocation2 + $0x10] sm:$0xff] %v832
        %841 = vst [vmem:[#allocation2 + $0x18] sm:$0xff] %v833
        %842 = vst [vmem:[#allocation2 + $0x20] sm:$0xff] %v834
        %843 = vst [vmem:[#allocation2 + $0x28] sm:$0xff] %v835
        %844 = vst [vmem:[#allocation2 + $0x30] sm:$0xff] %v836
        %845 = vst [vmem:[#allocation2 + $0x38] sm:$0xff] %v837
        %p846 = scmp.eq.s32.totalorder %s23, 3
        // Predicated region
        $region57: #{tpu_custom_call.1} parent=39 // pred_check
          %p847 = pneg %p846
        $region58: #{tpu_custom_call.1} parent=39 // pred_check_branch
          %849 = sbr.rel (%p847) target = $region60
        $region59: #{tpu_custom_call.1} parent=39 // pred_region
          %v850 = vld [vmem:[#allocation2] sm:$0xff]
          %v851 = vld [vmem:[#allocation2 + $0x8] sm:$0xff]
          %v852 = vld [vmem:[#allocation2 + $0x10] sm:$0xff]
          %v853 = vld [vmem:[#allocation2 + $0x18] sm:$0xff]
          %v854 = vld [vmem:[#allocation2 + $0x20] sm:$0xff]
          %v855 = vld [vmem:[#allocation2 + $0x28] sm:$0xff]
          %v856 = vld [vmem:[#allocation2 + $0x30] sm:$0xff]
          %v857 = vld [vmem:[#allocation2 + $0x38] sm:$0xff]
          %v858 = vmax.f32 %v850, 0.0
          %v859 = vmax.f32 %v851, 0.0
          %v860 = vmax.f32 %v852, 0.0
          %v861 = vmax.f32 %v853, 0.0
          %v862 = vmax.f32 %v854, 0.0
          %v863 = vmax.f32 %v855, 0.0
          %v864 = vmax.f32 %v856, 0.0
          %v865 = vmax.f32 %v857, 0.0
          %v866 = vsub.f32 %v858, %v862
          %v867 = vsub.f32 %v859, %v863
          %v868 = vsub.f32 %v860, %v864
          %v869 = vsub.f32 %v861, %v865
          %v870 = vand.u32 2147483647, %v866
          %v871 = vand.u32 2147483647, %v867
          %v872 = vand.u32 2147483647, %v868
          %v873 = vand.u32 2147483647, %v869
          %v874 = vld [vmem:[%s3] sm:$0xf]
          %v876 = vperm.slane %v874, 0
          %v877 = vperm.slane %v874, 1
          %v878 = vperm.slane %v874, 2
          %v879 = vperm.slane %v874, 3
          %v884 = vmul.f32 %v870, %v876
          %v885 = vmul.f32 %v871, %v877
          %v886 = vmul.f32 %v872, %v878
          %v887 = vmul.f32 %v873, %v879
          %v888 = vadd.f32 %v884, %v885
          %v889 = vadd.f32 %v888, %v886
          %v890 = vadd.f32 %v889, %v887
          %891 = vadd.xlane.f32.xlu0 %v890
          %v892 = vpop.xlane.xlu0 %891
          %s893 = sld [smem:[#allocation3]]
          %v894 = vstv %s893
          %v895 = vadd.f32 %v892, %v894
          %v896 = vxor.u32 %v895, 2147483648
          %v897 = vmul.f32 %v896, 1.442695
          %v898 = vpow.pop %v897
          %v899 = vadd.f32 %v898, 1.0
          %v900 = vrcp.pop %v899
          %v901 = vmul.f32 %v899, %v900
          %v902 = vsub.f32 1.0, %v901
          %v903 = vmul.f32 %v900, %v902
          %v904 = vadd.f32 %v900, %v903
          %vm905 = vweird.f32 %v899
          %vm906 = vweird.f32 %v900
          %vm907 = vmor %vm905, %vm906
          %v908 = vsel %vm907, %v900, %v904
          %v909 = vand.u32 2147483647, %v899
          %vm910 = vcmp.eq.f32.partialorder %v909, 8.507059e+37
          %v911 = vand.u32 %v899, 2147483648
          %v912 = vor.u32 1.1754944e-38, %v911
          %v913 = vsel %vm910, %v912, %v908
          %v914 = vmul.f32 1.0, %v913
          %vm915 = vcmask 7168
          %916 = vst.msk [vmem:[%s5] sm:$0xff] %vm915, %v914
        $region60: #{tpu_custom_call.1} parent=39 // pred_fallthru
          _
        // Predicated region
        $region61: #{tpu_custom_call.1} parent=39 // pred_check
          %p917 = pneg %p151
        $region62: #{tpu_custom_call.1} parent=39 // pred_check_branch
          %919 = sbr.rel (%p917) target = $region64
        $region63: #{tpu_custom_call.1} parent=39 // pred_region
          _
        $region64: #{tpu_custom_call.1} parent=39 // pred_fallthru
          _
        // Predicated region
        $region65: #{tpu_custom_call.1} parent=39 // pred_check
          %p920 = pneg %p151
        $region66: #{tpu_custom_call.1} parent=39 // pred_check_branch
          %922 = sbr.rel (%p920) target = $region68
        $region67: #{tpu_custom_call.1} parent=39 // pred_region
          _
        $region68: #{tpu_custom_call.1} parent=39 // pred_fallthru
          _
      $region40: #{tpu_custom_call.1} parent=5 // pred_fallthru
        _
      %p923 = scmp.le.s32.totalorder 2, %s18
      // Predicated region
      $region69: #{tpu_custom_call.1} parent=5 // pred_check
        %p924 = pneg %p923
      $region70: #{tpu_custom_call.1} parent=5 // pred_check_branch
        %926 = sbr.rel (%p924) target = $region72
      $region71: #{tpu_custom_call.1} parent=5 // pred_region
        %s927 = ssub.s32 %s18, 2
      $region72: #{tpu_custom_call.1} parent=5 // pred_fallthru
        _
    $region6: #{tpu_custom_call.1} parent=1 // loop_footer
      %s22 = sadd.s32 1, %s18
    $region7: #{tpu_custom_call.1} parent=1 // loop_footer_branch
      %17 = sbr.rel target = $region3
    $region8: #{tpu_custom_call.1} parent=1 // loop_exit
      _
    %928 = vsyncpa [#allocation5], 1
    %s929 = scalar_lea.sflag [#allocation5], 1
    %930 = vsyncpa %s929, 1
    %931 = vsyncpa [#allocation7], 1
    %s932 = scalar_lea.sflag [#allocation7], 1
    %933 = vsyncpa %s932, 1

</llo_original>
